<compile_context>
chip_gen: v7x
topology: tpu7x:2x2x1
jax: 0.10.0
libtpu: 0.0.40
codegen_flags: <defaults>
</compile_context>

<pallas_src>
import functools

import jax
import jax.numpy as jnp
from jax.experimental import pallas as pl
from jax.experimental.pallas import tpu as pltpu


def _round_up(a: int, m: int) -> int:
    return ((a + m - 1) // m) * m


def _sigmoid(h):
    # 1 / (1 + exp(-h)): exp and the divide both run on the EUP slot.
    return pl.reciprocal(1.0 + jnp.exp(-h), approx=False)


def _net_kernel(scale_ref, offset_ref, x_ref,
                w1_ref, b1_ref, w2_ref, b2_ref, w3_ref, b3_ref,
                o_ref):
    # encode: (x - xmin) / (xmax - xmin) == x*scale - offset   (stats hoisted)
    x_i = x_ref[...] * scale_ref[...] - offset_ref[...]               # (TM, D_in_p)

    # lin1 -> sigmoid
    h1 = jnp.dot(x_i, w1_ref[...], preferred_element_type=jnp.float32) + b1_ref[...]
    h1 = _sigmoid(h1)

    # lin2 -> sigmoid
    h2 = jnp.dot(h1, w2_ref[...], preferred_element_type=jnp.float32) + b2_ref[...]
    h2 = _sigmoid(h2)

    # lin3 (no activation) -> lane-dense store
    o_ref[...] = jnp.dot(h2, w3_ref[...], preferred_element_type=jnp.float32) + b3_ref[...]


@functools.partial(jax.jit, static_argnames=("tm",))
def net_forward(x, w1, b1, w2, b2, w3, b3, *, tm: int = 1024):
    """x: (N, D_in); wK: (in, out); bK: (1, out). Returns (N, D_out) float32."""
    N, D_in = x.shape
    H = w1.shape[1]
    D_out = w3.shape[1]

    x = x.astype(jnp.float32)

    # ---- encode statistics over the FULL batch (PyTorch semantics) ----
    xmin = jnp.min(x, axis=0, keepdims=True)                      # (1, D_in)
    xmax = jnp.max(x, axis=0, keepdims=True)                      # (1, D_in)
    scale = 1.0 / (xmax - xmin)                                   # (1, D_in)
    offset = xmin * scale                                         # (1, D_in)

    # ---- pad feature dims to lane width (128) and batch to the tile size ----
    d_in_p = _round_up(D_in, 128)
    h_p = _round_up(H, 128)
    d_out_p = _round_up(D_out, 128)

    n_p = _round_up(N, 8)
    tm_eff = min(tm, n_p)
    n_p = _round_up(n_p, tm_eff)

    xp = jnp.zeros((n_p, d_in_p), jnp.float32).at[:N, :D_in].set(x)
    # padded feature columns get scale=0, offset=0 -> x_i = 0 there (no NaNs)
    scale_p = jnp.zeros((1, d_in_p), jnp.float32).at[:, :D_in].set(scale)
    offset_p = jnp.zeros((1, d_in_p), jnp.float32).at[:, :D_in].set(offset)

    w1p = jnp.zeros((d_in_p, h_p), jnp.float32).at[:D_in, :H].set(w1)
    b1p = jnp.zeros((1, h_p), jnp.float32).at[:, :H].set(b1)
    w2p = jnp.zeros((h_p, h_p), jnp.float32).at[:H, :H].set(w2)
    b2p = jnp.zeros((1, h_p), jnp.float32).at[:, :H].set(b2)
    w3p = jnp.zeros((h_p, d_out_p), jnp.float32).at[:H, :D_out].set(w3)
    b3p = jnp.zeros((1, d_out_p), jnp.float32).at[:, :D_out].set(b3)

    grid = (n_p // tm_eff,)

    # Constant index_map -> DMA'd once, VMEM-resident across all grid steps.
    resident = lambda shape: pl.BlockSpec(shape, lambda i: (0, 0))

    flops = 2 * n_p * (d_in_p * h_p + h_p * h_p + h_p * d_out_p)
    bytes_accessed = 4 * (n_p * d_in_p + n_p * d_out_p
                          + d_in_p * h_p + h_p * h_p + h_p * d_out_p)

    out = pl.pallas_call(
        _net_kernel,
        out_shape=jax.ShapeDtypeStruct((n_p, d_out_p), jnp.float32),
        grid=grid,
        in_specs=[
            resident((1, d_in_p)),                                 # scale
            resident((1, d_in_p)),                                 # offset
            pl.BlockSpec((tm_eff, d_in_p), lambda i: (i, 0)),      # x (pipelined)
            resident((d_in_p, h_p)),                               # w1
            resident((1, h_p)),                                    # b1
            resident((h_p, h_p)),                                  # w2
            resident((1, h_p)),                                    # b2
            resident((h_p, d_out_p)),                              # w3
            resident((1, d_out_p)),                                # b3
        ],
        out_specs=pl.BlockSpec((tm_eff, d_out_p), lambda i: (i, 0)),
        compiler_params=pltpu.CompilerParams(
            dimension_semantics=("parallel",),
        ),
        cost_estimate=pl.CostEstimate(
            flops=flops,
            transcendentals=2 * n_p * h_p,
            bytes_accessed=bytes_accessed,
        ),
    )(scale_p, offset_p, xp, w1p, b1p, w2p, b2p, w3p, b3p)

    return out[:N, :D_out]


def _reference_forward(x, w1, b1, w2, b2, w3, b3):
    xmin = jnp.min(x, axis=0, keepdims=True)
    xmax = jnp.max(x, axis=0, keepdims=True)
    x_i = (x - xmin) / (xmax - xmin)
    h1 = jax.nn.sigmoid(x_i @ w1 + b1)
    h2 = jax.nn.sigmoid(h1 @ w2 + b2)
    return h2 @ w3 + b3


if __name__ == "__main__":
    # Small shapes consistent with Net(D_in, H, D_out)
    N, D_in, H, D_out = 8, 32, 64, 16

    key = jax.random.PRNGKey(0)
    kx, k1, k2, k3, kb1, kb2, kb3 = jax.random.split(key, 7)

    x = jax.random.normal(kx, (N, D_in), dtype=jnp.float32)

    # Deterministic synthetic parameters (torch nn.Linear weights, stored transposed).
    w1 = 0.1 * jax.random.normal(k1, (D_in, H), dtype=jnp.float32)
    b1 = 0.1 * jax.random.normal(kb1, (1, H), dtype=jnp.float32)
    w2 = 0.1 * jax.random.normal(k2, (H, H), dtype=jnp.float32)
    b2 = 0.1 * jax.random.normal(kb2, (1, H), dtype=jnp.float32)
    w3 = 0.1 * jax.random.normal(k3, (H, D_out), dtype=jnp.float32)
    b3 = 0.1 * jax.random.normal(kb3, (1, D_out), dtype=jnp.float32)

    # Single-tile path.
    y = net_forward(x, w1, b1, w2, b2, w3, b3)
    y = jax.block_until_ready(y)
    y_ref = _reference_forward(x, w1, b1, w2, b2, w3, b3)
    assert y.shape == (N, D_out)
    assert jnp.allclose(y, y_ref, atol=1e-5, rtol=1e-5)

    # Multi-tile path: batch larger than the tile, exercising the grid +
    # resident-weight BlockSpecs (tm=8 -> grid of 3 steps).
    N2 = 24
    x2 = jax.random.normal(jax.random.PRNGKey(1), (N2, D_in), dtype=jnp.float32)
    y2 = net_forward(x2, w1, b1, w2, b2, w3, b3, tm=8)
    y2 = jax.block_until_ready(y2)
    y2_ref = _reference_forward(x2, w1, b1, w2, b2, w3, b3)
    assert y2.shape == (N2, D_out)
    assert jnp.allclose(y2, y2_ref, atol=1e-5, rtol=1e-5)

    print("KERNEL_OK")
</pallas_src>

<mosaic_0001>
module attributes {stable_mosaic.version = 11 : i64} {
  func.func @_net_kernel(%arg0: i32, %arg1: memref<1x128xf32, #tpu.memory_space<vmem>>, %arg2: memref<1x128xf32, #tpu.memory_space<vmem>>, %arg3: memref<8x128xf32, #tpu.memory_space<vmem>>, %arg4: memref<128x128xf32, #tpu.memory_space<vmem>>, %arg5: memref<1x128xf32, #tpu.memory_space<vmem>>, %arg6: memref<128x128xf32, #tpu.memory_space<vmem>>, %arg7: memref<1x128xf32, #tpu.memory_space<vmem>>, %arg8: memref<128x128xf32, #tpu.memory_space<vmem>>, %arg9: memref<1x128xf32, #tpu.memory_space<vmem>>, %arg10: memref<8x128xf32, #tpu.memory_space<vmem>>) attributes {dimension_semantics = [#tpu.dimension_semantics<parallel>], iteration_bounds = array<i64: 1>, scalar_prefetch = 0 : i64, scratch_operands = 0 : i64, tpu.core_type = #tpu.core_type<tc>, window_params = [{pipeline_mode = #tpu.pipeline_mode<synchronous>, transform_indices = @transform_0, window_bounds = array<i64: 1, 128>}, {pipeline_mode = #tpu.pipeline_mode<synchronous>, transform_indices = @transform_1, window_bounds = array<i64: 1, 128>}, {transform_indices = @transform_2, window_bounds = array<i64: 8, 128>}, {pipeline_mode = #tpu.pipeline_mode<synchronous>, transform_indices = @transform_3, window_bounds = array<i64: 128, 128>}, {pipeline_mode = #tpu.pipeline_mode<synchronous>, transform_indices = @transform_4, window_bounds = array<i64: 1, 128>}, {pipeline_mode = #tpu.pipeline_mode<synchronous>, transform_indices = @transform_5, window_bounds = array<i64: 128, 128>}, {pipeline_mode = #tpu.pipeline_mode<synchronous>, transform_indices = @transform_6, window_bounds = array<i64: 1, 128>}, {pipeline_mode = #tpu.pipeline_mode<synchronous>, transform_indices = @transform_7, window_bounds = array<i64: 128, 128>}, {pipeline_mode = #tpu.pipeline_mode<synchronous>, transform_indices = @transform_8, window_bounds = array<i64: 1, 128>}, {transform_indices = @transform_9, window_bounds = array<i64: 8, 128>}]} {
    %c0 = arith.constant 0 : index
    %c0_0 = arith.constant 0 : index
    %0 = vector.load %arg3[%c0, %c0_0] : memref<8x128xf32, #tpu.memory_space<vmem>>, vector<8x128xf32>
    %c0_1 = arith.constant 0 : index
    %c0_2 = arith.constant 0 : index
    %1 = vector.load %arg1[%c0_1, %c0_2] : memref<1x128xf32, #tpu.memory_space<vmem>>, vector<1x128xf32>
    %2 = vector.broadcast %1 : vector<1x128xf32> to vector<8x128xf32>
    %3 = arith.mulf %0, %2 : vector<8x128xf32>
    %c0_3 = arith.constant 0 : index
    %c0_4 = arith.constant 0 : index
    %4 = vector.load %arg2[%c0_3, %c0_4] : memref<1x128xf32, #tpu.memory_space<vmem>>, vector<1x128xf32>
    %5 = vector.broadcast %4 : vector<1x128xf32> to vector<8x128xf32>
    %6 = arith.subf %3, %5 : vector<8x128xf32>
    %c0_5 = arith.constant 0 : index
    %c0_6 = arith.constant 0 : index
    %7 = vector.load %arg4[%c0_5, %c0_6] : memref<128x128xf32, #tpu.memory_space<vmem>>, vector<128x128xf32>
    %cst = arith.constant dense<0.000000e+00> : vector<8x128xf32>
    %8 = tpu.matmul %6, %7, %cst {dimension_numbers = #tpu.dot_dimension_numbers<[1], [0], [0], [1], [0, 0, 1, 1], [], []>} : vector<8x128xf32>, vector<128x128xf32>, vector<8x128xf32> -> vector<8x128xf32>
    %c0_7 = arith.constant 0 : index
    %c0_8 = arith.constant 0 : index
    %9 = vector.load %arg5[%c0_7, %c0_8] : memref<1x128xf32, #tpu.memory_space<vmem>>, vector<1x128xf32>
    %10 = vector.broadcast %9 : vector<1x128xf32> to vector<8x128xf32>
    %11 = arith.addf %8, %10 : vector<8x128xf32>
    %cst_9 = arith.constant 0.000000e+00 : f32
    %12 = vector.broadcast %cst_9 : f32 to vector<8x128xf32>
    %13 = arith.subf %12, %11 : vector<8x128xf32>
    %14 = math.exp %13 : vector<8x128xf32>
    %cst_10 = arith.constant 1.000000e+00 : f32
    %15 = vector.broadcast %cst_10 : f32 to vector<8x128xf32>
    %16 = arith.addf %15, %14 : vector<8x128xf32>
    %17 = tpu.reciprocal %16 : vector<8x128xf32> -> vector<8x128xf32>
    %c0_11 = arith.constant 0 : index
    %c0_12 = arith.constant 0 : index
    %18 = vector.load %arg6[%c0_11, %c0_12] : memref<128x128xf32, #tpu.memory_space<vmem>>, vector<128x128xf32>
    %cst_13 = arith.constant dense<0.000000e+00> : vector<8x128xf32>
    %19 = tpu.matmul %17, %18, %cst_13 {dimension_numbers = #tpu.dot_dimension_numbers<[1], [0], [0], [1], [0, 0, 1, 1], [], []>} : vector<8x128xf32>, vector<128x128xf32>, vector<8x128xf32> -> vector<8x128xf32>
    %c0_14 = arith.constant 0 : index
    %c0_15 = arith.constant 0 : index
    %20 = vector.load %arg7[%c0_14, %c0_15] : memref<1x128xf32, #tpu.memory_space<vmem>>, vector<1x128xf32>
    %21 = vector.broadcast %20 : vector<1x128xf32> to vector<8x128xf32>
    %22 = arith.addf %19, %21 : vector<8x128xf32>
    %cst_16 = arith.constant 0.000000e+00 : f32
    %23 = vector.broadcast %cst_16 : f32 to vector<8x128xf32>
    %24 = arith.subf %23, %22 : vector<8x128xf32>
    %25 = math.exp %24 : vector<8x128xf32>
    %cst_17 = arith.constant 1.000000e+00 : f32
    %26 = vector.broadcast %cst_17 : f32 to vector<8x128xf32>
    %27 = arith.addf %26, %25 : vector<8x128xf32>
    %28 = tpu.reciprocal %27 : vector<8x128xf32> -> vector<8x128xf32>
    %c0_18 = arith.constant 0 : index
    %c0_19 = arith.constant 0 : index
    %29 = vector.load %arg8[%c0_18, %c0_19] : memref<128x128xf32, #tpu.memory_space<vmem>>, vector<128x128xf32>
    %cst_20 = arith.constant dense<0.000000e+00> : vector<8x128xf32>
    %30 = tpu.matmul %28, %29, %cst_20 {dimension_numbers = #tpu.dot_dimension_numbers<[1], [0], [0], [1], [0, 0, 1, 1], [], []>} : vector<8x128xf32>, vector<128x128xf32>, vector<8x128xf32> -> vector<8x128xf32>
    %c0_21 = arith.constant 0 : index
    %c0_22 = arith.constant 0 : index
    %31 = vector.load %arg9[%c0_21, %c0_22] : memref<1x128xf32, #tpu.memory_space<vmem>>, vector<1x128xf32>
    %32 = vector.broadcast %31 : vector<1x128xf32> to vector<8x128xf32>
    %33 = arith.addf %30, %32 : vector<8x128xf32>
    %c0_23 = arith.constant 0 : index
    %c0_24 = arith.constant 0 : index
    %34 = vector.load %arg10[%c0_23, %c0_24] : memref<8x128xf32, #tpu.memory_space<vmem>>, vector<8x128xf32>
    tpu.vector_store %arg10[%c0_23, %c0_24], %33 {strides = array<i32>} : memref<8x128xf32, #tpu.memory_space<vmem>>, vector<8x128xf32>,
    return
  }
  func.func @transform_0(%arg0: i32) -> (i32, i32) {
    %c0_i32 = arith.constant 0 : i32
    %c0_i32_0 = arith.constant 0 : i32
    %c0_i32_1 = arith.constant 0 : i32
    return %c0_i32, %c0_i32_0 : i32, i32
  }
  func.func @transform_1(%arg0: i32) -> (i32, i32) {
    %c0_i32 = arith.constant 0 : i32
    %c0_i32_0 = arith.constant 0 : i32
    %c0_i32_1 = arith.constant 0 : i32
    return %c0_i32, %c0_i32_0 : i32, i32
  }
  func.func @transform_2(%arg0: i32) -> (i32, i32) {
    %c0_i32 = arith.constant 0 : i32
    %c0_i32_0 = arith.constant 0 : i32
    return %arg0, %c0_i32 : i32, i32
  }
  func.func @transform_3(%arg0: i32) -> (i32, i32) {
    %c0_i32 = arith.constant 0 : i32
    %c0_i32_0 = arith.constant 0 : i32
    %c0_i32_1 = arith.constant 0 : i32
    return %c0_i32, %c0_i32_0 : i32, i32
  }
  func.func @transform_4(%arg0: i32) -> (i32, i32) {
    %c0_i32 = arith.constant 0 : i32
    %c0_i32_0 = arith.constant 0 : i32
    %c0_i32_1 = arith.constant 0 : i32
    return %c0_i32, %c0_i32_0 : i32, i32
  }
  func.func @transform_5(%arg0: i32) -> (i32, i32) {
    %c0_i32 = arith.constant 0 : i32
    %c0_i32_0 = arith.constant 0 : i32
    %c0_i32_1 = arith.constant 0 : i32
    return %c0_i32, %c0_i32_0 : i32, i32
  }
  func.func @transform_6(%arg0: i32) -> (i32, i32) {
    %c0_i32 = arith.constant 0 : i32
    %c0_i32_0 = arith.constant 0 : i32
    %c0_i32_1 = arith.constant 0 : i32
    return %c0_i32, %c0_i32_0 : i32, i32
  }
  func.func @transform_7(%arg0: i32) -> (i32, i32) {
    %c0_i32 = arith.constant 0 : i32
    %c0_i32_0 = arith.constant 0 : i32
    %c0_i32_1 = arith.constant 0 : i32
    return %c0_i32, %c0_i32_0 : i32, i32
  }
  func.func @transform_8(%arg0: i32) -> (i32, i32) {
    %c0_i32 = arith.constant 0 : i32
    %c0_i32_0 = arith.constant 0 : i32
    %c0_i32_1 = arith.constant 0 : i32
    return %c0_i32, %c0_i32_0 : i32, i32
  }
  func.func @transform_9(%arg0: i32) -> (i32, i32) {
    %c0_i32 = arith.constant 0 : i32
    %c0_i32_0 = arith.constant 0 : i32
    return %arg0, %c0_i32 : i32, i32
  }
}

</mosaic_0001>

<llo_original>
// kernel: net_forward.1
$region0: #{net_forward.1}
  #allocation0 [shape = 'u32[]', space=smem, size = 0x4, offset = 0x4, fixed_abs, tag = 'smem constant byte address 0x4 - core index']
  #allocation1 [shape = 'u32[144,128]{1,0:T(1,128)}', space=vmem, size = 0x12000, scoped, tag = 'internal scratch']
  %s0 = inlined_call_operand.vmem [shape: f32[1,128], index: 0, kind: input, shape index: {}]
  %s1 = inlined_call_operand.vmem [shape: f32[1,128], index: 1, kind: input, shape index: {}]
  %s2 = inlined_call_operand.vmem [shape: f32[8,128], index: 2, kind: input, shape index: {}]
  %s3 = inlined_call_operand.vmem [shape: f32[128,128], index: 3, kind: input, shape index: {}]
  %s4 = inlined_call_operand.vmem [shape: f32[1,128], index: 4, kind: input, shape index: {}]
  %s5 = inlined_call_operand.vmem [shape: f32[128,128], index: 5, kind: input, shape index: {}]
  %s6 = inlined_call_operand.vmem [shape: f32[1,128], index: 6, kind: input, shape index: {}]
  %s7 = inlined_call_operand.vmem [shape: f32[128,128], index: 7, kind: input, shape index: {}]
  %s8 = inlined_call_operand.vmem [shape: f32[1,128], index: 8, kind: input, shape index: {}]
  %s9 = inlined_call_operand.hbm [shape: f32[8,128], index: 9, kind: output, shape index: {}]
  %s10 = sld [smem:[#allocation0]]
  $region46: #{net_forward.1} parent=0
    _
  %s12 = ssub.s32 1, %s10
  %s13 = scalar_select 0, %s12, %s10
  $region1: #{net_forward.1} parent=0
    #allocation2 [shape = 'u8[4096]{0}', space=vmem, size = 0x1000, scoped, tag = 'output window, operand 0, single buffered']
    #allocation3 [shape = 's32[1]{0}', space=sflag, size = 0x4, scoped, tag = 'scoped memory for net_forward.1']
    %14 = vsyncpa [#allocation3], 0
    // Predicated region
    $region2: #{net_forward.1} parent=1 // pred_check
      _
    $region3: #{net_forward.1} parent=1 // pred_check_branch
      %16 = sbr.rel (0) target = $region5
    $region4: #{net_forward.1} parent=1 // pred_region
      _
    $region5: #{net_forward.1} parent=1 // pred_fallthru
      _
    // Predicated region
    $region6: #{net_forward.1} parent=1 // pred_check
      _
    $region7: #{net_forward.1} parent=1 // pred_check_branch
      %18 = sbr.rel (0) target = $region9
    $region8: #{net_forward.1} parent=1 // pred_region
      _
    $region9: #{net_forward.1} parent=1 // pred_fallthru
      _
    // Predicated region
    $region10: #{net_forward.1} parent=1 // pred_check
      _
    $region11: #{net_forward.1} parent=1 // pred_check_branch
      %20 = sbr.rel (0) target = $region13
    $region12: #{net_forward.1} parent=1 // pred_region
      _
    $region13: #{net_forward.1} parent=1 // pred_fallthru
      _
    // Predicated region
    $region14: #{net_forward.1} parent=1 // pred_check
      _
    $region15: #{net_forward.1} parent=1 // pred_check_branch
      %22 = sbr.rel (0) target = $region17
    $region16: #{net_forward.1} parent=1 // pred_region
      _
    $region17: #{net_forward.1} parent=1 // pred_fallthru
      _
    // Predicated region
    $region18: #{net_forward.1} parent=1 // pred_check
      _
    $region19: #{net_forward.1} parent=1 // pred_check_branch
      %24 = sbr.rel (0) target = $region21
    $region20: #{net_forward.1} parent=1 // pred_region
      _
    $region21: #{net_forward.1} parent=1 // pred_fallthru
      _
    // Predicated region
    $region22: #{net_forward.1} parent=1 // pred_check
      _
    $region23: #{net_forward.1} parent=1 // pred_check_branch
      %26 = sbr.rel (0) target = $region25
    $region24: #{net_forward.1} parent=1 // pred_region
      _
    $region25: #{net_forward.1} parent=1 // pred_fallthru
      _
    // Predicated region
    $region26: #{net_forward.1} parent=1 // pred_check
      _
    $region27: #{net_forward.1} parent=1 // pred_check_branch
      %28 = sbr.rel (0) target = $region29
    $region28: #{net_forward.1} parent=1 // pred_region
      _
    $region29: #{net_forward.1} parent=1 // pred_fallthru
      _
    // Predicated region
    $region30: #{net_forward.1} parent=1 // pred_check
      _
    $region31: #{net_forward.1} parent=1 // pred_check_branch
      %30 = sbr.rel (0) target = $region33
    $region32: #{net_forward.1} parent=1 // pred_region
      _
    $region33: #{net_forward.1} parent=1 // pred_fallthru
      _
    // Predicated region
    $region34: #{net_forward.1} parent=1 // pred_check
      _
    $region35: #{net_forward.1} parent=1 // pred_check_branch
      %32 = sbr.rel (0) target = $region37
    $region36: #{net_forward.1} parent=1 // pred_region
      _
    $region37: #{net_forward.1} parent=1 // pred_fallthru
      _
    %v33 = vld [vmem:[%s2] sm:$0xff]
    %v34 = vld [vmem:[%s0] sm:$0x1]
    %v36 = vlaneseq
    %v37 = vshrl.u32 %v36, 7
    %v38 = vsub.s32 0, %v37
    %v39 = vrot.slane %v34, %v38
    %v41 = vmul.f32 %v33, %v39
    %v42 = vld [vmem:[%s1] sm:$0x1]
    %v44 = vlaneseq
    %v45 = vshrl.u32 %v44, 7
    %v46 = vsub.s32 0, %v45
    %v47 = vrot.slane %v42, %v46
    %v49 = vsub.f32 %v41, %v47
    %v50 = vld [vmem:[%s3] sm:$0xff]
    %v51 = vld [vmem:[%s3 + $0x8] sm:$0xff]
    %v52 = vld [vmem:[%s3 + $0x10] sm:$0xff]
    %v53 = vld [vmem:[%s3 + $0x18] sm:$0xff]
    %v54 = vld [vmem:[%s3 + $0x20] sm:$0xff]
    %v55 = vld [vmem:[%s3 + $0x28] sm:$0xff]
    %v56 = vld [vmem:[%s3 + $0x30] sm:$0xff]
    %v57 = vld [vmem:[%s3 + $0x38] sm:$0xff]
    %v58 = vld [vmem:[%s3 + $0x40] sm:$0xff]
    %v59 = vld [vmem:[%s3 + $0x48] sm:$0xff]
    %v60 = vld [vmem:[%s3 + $0x50] sm:$0xff]
    %v61 = vld [vmem:[%s3 + $0x58] sm:$0xff]
    %v62 = vld [vmem:[%s3 + $0x60] sm:$0xff]
    %v63 = vld [vmem:[%s3 + $0x68] sm:$0xff]
    %v64 = vld [vmem:[%s3 + $0x70] sm:$0xff]
    %v65 = vld [vmem:[%s3 + $0x78] sm:$0xff]
    %v66 = vld [vmem:[%s4] sm:$0x1]
    %v68 = vlaneseq
    %v69 = vshrl.u32 %v68, 7
    %v70 = vsub.s32 0, %v69
    %v71 = vrot.slane %v66, %v70
    %73 = vmatprep.subr.mxu0 0.0
    %74 = vmatpush1.msra.mxu0 %v50
    %75 = vmatprep.subr.mxu0 0.0
    %76 = vmatpush1.msra.mxu0 %v51
    %77 = vmatprep.subr.mxu0 0.0
    %78 = vmatpush1.msra.mxu0 %v52
    %79 = vmatprep.subr.mxu0 0.0
    %80 = vmatpush1.msra.mxu0 %v53
    %81 = vmatprep.subr.mxu0 0.0
    %82 = vmatpush1.msra.mxu0 %v54
    %83 = vmatprep.subr.mxu0 0.0
    %84 = vmatpush1.msra.mxu0 %v55
    %85 = vmatprep.subr.mxu0 0.0
    %86 = vmatpush1.msra.mxu0 %v56
    %87 = vmatprep.subr.mxu0 0.0
    %88 = vmatpush1.msra.mxu0 %v57
    %89 = vmatprep.subr.mxu0 0.0
    %90 = vmatpush1.msra.mxu0 %v58
    %91 = vmatprep.subr.mxu0 0.0
    %92 = vmatpush1.msra.mxu0 %v59
    %93 = vmatprep.subr.mxu0 0.0
    %94 = vmatpush1.msra.mxu0 %v60
    %95 = vmatprep.subr.mxu0 0.0
    %96 = vmatpush1.msra.mxu0 %v61
    %97 = vmatprep.subr.mxu0 0.0
    %98 = vmatpush1.msra.mxu0 %v62
    %99 = vmatprep.subr.mxu0 0.0
    %100 = vmatpush1.msra.mxu0 %v63
    %101 = vmatprep.subr.mxu0 0.0
    %102 = vmatpush1.msra.mxu0 %v64
    %103 = vmatprep.subr.mxu0 0.0
    %104 = vmatpush1.msra.mxu0 %v65
    %105 = vmatprep.subr.mxu0 0.0
    %106 = vmatpush1.msra.mxu0 0.0
    %107 = vmatprep.subr.mxu0 0.0
    %108 = vmatpush1.msra.mxu0 0.0
    %109 = vmatprep.subr.mxu0 0.0
    %110 = vmatpush1.msra.mxu0 0.0
    %111 = vmatprep.subr.mxu0 0.0
    %112 = vmatpush1.msra.mxu0 0.0
    %113 = vmatprep.subr.mxu0 0.0
    %114 = vmatpush1.msra.mxu0 0.0
    %115 = vmatprep.subr.mxu0 0.0
    %116 = vmatpush1.msra.mxu0 0.0
    %117 = vmatprep.subr.mxu0 0.0
    %118 = vmatpush1.msra.mxu0 0.0
    %119 = vmatprep.subr.mxu0 0.0
    %120 = vmatpush1.msra.mxu0 0.0
    %121 = vmatprep.subr.mxu0 0.0
    %122 = vmatpush1.msra.mxu0 0.0
    %123 = vmatprep.subr.mxu0 0.0
    %124 = vmatpush1.msra.mxu0 0.0
    %125 = vmatprep.subr.mxu0 0.0
    %126 = vmatpush1.msra.mxu0 0.0
    %127 = vmatprep.subr.mxu0 0.0
    %128 = vmatpush1.msra.mxu0 0.0
    %129 = vmatprep.subr.mxu0 0.0
    %130 = vmatpush1.msra.mxu0 0.0
    %131 = vmatprep.subr.mxu0 0.0
    %132 = vmatpush1.msra.mxu0 0.0
    %133 = vmatprep.subr.mxu0 0.0
    %134 = vmatpush1.msra.mxu0 0.0
    %135 = vmatprep.subr.mxu0 0.0
    %136 = vmatpush1.msra.mxu0 0.0
    %137 = vmatprep.mubr.f32.mxu0 0.0
    %138 = vmatmul.mubr.f32.gmra.mrb[0].mxu0 %v49
    %v139 = vpop.f32.mrb[0].mxu0
    %v140 = vadd.f32 %v71, %v139
    %v141 = vpop.f32.mrb[0].mxu0
    %142 = vdwg.mxu0
    %v143 = vsub.f32 0.0, %v140
    %v144 = vmul.f32 %v143, 1.442695
    %v145 = vpow.pop %v144
    %v146 = vadd.f32 %v145, 1.0
    %v147 = vrcp.pop %v146
    %v148 = vld [vmem:[%s5] sm:$0xff]
    %v149 = vld [vmem:[%s5 + $0x8] sm:$0xff]
    %v150 = vld [vmem:[%s5 + $0x10] sm:$0xff]
    %v151 = vld [vmem:[%s5 + $0x18] sm:$0xff]
    %v152 = vld [vmem:[%s5 + $0x20] sm:$0xff]
    %v153 = vld [vmem:[%s5 + $0x28] sm:$0xff]
    %v154 = vld [vmem:[%s5 + $0x30] sm:$0xff]
    %v155 = vld [vmem:[%s5 + $0x38] sm:$0xff]
    %v156 = vld [vmem:[%s5 + $0x40] sm:$0xff]
    %v157 = vld [vmem:[%s5 + $0x48] sm:$0xff]
    %v158 = vld [vmem:[%s5 + $0x50] sm:$0xff]
    %v159 = vld [vmem:[%s5 + $0x58] sm:$0xff]
    %v160 = vld [vmem:[%s5 + $0x60] sm:$0xff]
    %v161 = vld [vmem:[%s5 + $0x68] sm:$0xff]
    %v162 = vld [vmem:[%s5 + $0x70] sm:$0xff]
    %v163 = vld [vmem:[%s5 + $0x78] sm:$0xff]
    %v164 = vld [vmem:[%s6] sm:$0x1]
    %v166 = vlaneseq
    %v167 = vshrl.u32 %v166, 7
    %v168 = vsub.s32 0, %v167
    %v169 = vrot.slane %v164, %v168
    %171 = vmatprep.subr.mxu0 0.0
    %172 = vmatpush1.msra.mxu0 %v148
    %173 = vmatprep.subr.mxu0 0.0
    %174 = vmatpush1.msra.mxu0 %v149
    %175 = vmatprep.subr.mxu0 0.0
    %176 = vmatpush1.msra.mxu0 %v150
    %177 = vmatprep.subr.mxu0 0.0
    %178 = vmatpush1.msra.mxu0 %v151
    %179 = vmatprep.subr.mxu0 0.0
    %180 = vmatpush1.msra.mxu0 %v152
    %181 = vmatprep.subr.mxu0 0.0
    %182 = vmatpush1.msra.mxu0 %v153
    %183 = vmatprep.subr.mxu0 0.0
    %184 = vmatpush1.msra.mxu0 %v154
    %185 = vmatprep.subr.mxu0 0.0
    %186 = vmatpush1.msra.mxu0 %v155
    %187 = vmatprep.subr.mxu0 0.0
    %188 = vmatpush1.msra.mxu0 %v156
    %189 = vmatprep.subr.mxu0 0.0
    %190 = vmatpush1.msra.mxu0 %v157
    %191 = vmatprep.subr.mxu0 0.0
    %192 = vmatpush1.msra.mxu0 %v158
    %193 = vmatprep.subr.mxu0 0.0
    %194 = vmatpush1.msra.mxu0 %v159
    %195 = vmatprep.subr.mxu0 0.0
    %196 = vmatpush1.msra.mxu0 %v160
    %197 = vmatprep.subr.mxu0 0.0
    %198 = vmatpush1.msra.mxu0 %v161
    %199 = vmatprep.subr.mxu0 0.0
    %200 = vmatpush1.msra.mxu0 %v162
    %201 = vmatprep.subr.mxu0 0.0
    %202 = vmatpush1.msra.mxu0 %v163
    %203 = vmatprep.subr.mxu0 0.0
    %204 = vmatpush1.msra.mxu0 0.0
    %205 = vmatprep.subr.mxu0 0.0
    %206 = vmatpush1.msra.mxu0 0.0
    %207 = vmatprep.subr.mxu0 0.0
    %208 = vmatpush1.msra.mxu0 0.0
    %209 = vmatprep.subr.mxu0 0.0
    %210 = vmatpush1.msra.mxu0 0.0
    %211 = vmatprep.subr.mxu0 0.0
    %212 = vmatpush1.msra.mxu0 0.0
    %213 = vmatprep.subr.mxu0 0.0
    %214 = vmatpush1.msra.mxu0 0.0
    %215 = vmatprep.subr.mxu0 0.0
    %216 = vmatpush1.msra.mxu0 0.0
    %217 = vmatprep.subr.mxu0 0.0
    %218 = vmatpush1.msra.mxu0 0.0
    %219 = vmatprep.subr.mxu0 0.0
    %220 = vmatpush1.msra.mxu0 0.0
    %221 = vmatprep.subr.mxu0 0.0
    %222 = vmatpush1.msra.mxu0 0.0
    %223 = vmatprep.subr.mxu0 0.0
    %224 = vmatpush1.msra.mxu0 0.0
    %225 = vmatprep.subr.mxu0 0.0
    %226 = vmatpush1.msra.mxu0 0.0
    %227 = vmatprep.subr.mxu0 0.0
    %228 = vmatpush1.msra.mxu0 0.0
    %229 = vmatprep.subr.mxu0 0.0
    %230 = vmatpush1.msra.mxu0 0.0
    %231 = vmatprep.subr.mxu0 0.0
    %232 = vmatpush1.msra.mxu0 0.0
    %233 = vmatprep.subr.mxu0 0.0
    %234 = vmatpush1.msra.mxu0 0.0
    %235 = vmatprep.mubr.f32.mxu0 0.0
    %236 = vmatmul.mubr.f32.gmra.mrb[0].mxu0 %v147
    %v237 = vpop.f32.mrb[0].mxu0
    %v238 = vadd.f32 %v169, %v237
    %v239 = vpop.f32.mrb[0].mxu0
    %240 = vdwg.mxu0
    %v241 = vsub.f32 0.0, %v238
    %v242 = vmul.f32 %v241, 1.442695
    %v243 = vpow.pop %v242
    %v244 = vadd.f32 %v243, 1.0
    %v245 = vrcp.pop %v244
    %v246 = vld [vmem:[%s7] sm:$0xff]
    %v247 = vld [vmem:[%s7 + $0x8] sm:$0xff]
    %v248 = vld [vmem:[%s7 + $0x10] sm:$0xff]
    %v249 = vld [vmem:[%s7 + $0x18] sm:$0xff]
    %v250 = vld [vmem:[%s7 + $0x20] sm:$0xff]
    %v251 = vld [vmem:[%s7 + $0x28] sm:$0xff]
    %v252 = vld [vmem:[%s7 + $0x30] sm:$0xff]
    %v253 = vld [vmem:[%s7 + $0x38] sm:$0xff]
    %v254 = vld [vmem:[%s7 + $0x40] sm:$0xff]
    %v255 = vld [vmem:[%s7 + $0x48] sm:$0xff]
    %v256 = vld [vmem:[%s7 + $0x50] sm:$0xff]
    %v257 = vld [vmem:[%s7 + $0x58] sm:$0xff]
    %v258 = vld [vmem:[%s7 + $0x60] sm:$0xff]
    %v259 = vld [vmem:[%s7 + $0x68] sm:$0xff]
    %v260 = vld [vmem:[%s7 + $0x70] sm:$0xff]
    %v261 = vld [vmem:[%s7 + $0x78] sm:$0xff]
    %v262 = vld [vmem:[%s8] sm:$0x1]
    %v264 = vlaneseq
    %v265 = vshrl.u32 %v264, 7
    %v266 = vsub.s32 0, %v265
    %v267 = vrot.slane %v262, %v266
    %269 = vmatprep.subr.mxu0 0.0
    %270 = vmatpush1.msra.mxu0 %v246
    %271 = vmatprep.subr.mxu0 0.0
    %272 = vmatpush1.msra.mxu0 %v247
    %273 = vmatprep.subr.mxu0 0.0
    %274 = vmatpush1.msra.mxu0 %v248
    %275 = vmatprep.subr.mxu0 0.0
    %276 = vmatpush1.msra.mxu0 %v249
    %277 = vmatprep.subr.mxu0 0.0
    %278 = vmatpush1.msra.mxu0 %v250
    %279 = vmatprep.subr.mxu0 0.0
    %280 = vmatpush1.msra.mxu0 %v251
    %281 = vmatprep.subr.mxu0 0.0
    %282 = vmatpush1.msra.mxu0 %v252
    %283 = vmatprep.subr.mxu0 0.0
    %284 = vmatpush1.msra.mxu0 %v253
    %285 = vmatprep.subr.mxu0 0.0
    %286 = vmatpush1.msra.mxu0 %v254
    %287 = vmatprep.subr.mxu0 0.0
    %288 = vmatpush1.msra.mxu0 %v255
    %289 = vmatprep.subr.mxu0 0.0
    %290 = vmatpush1.msra.mxu0 %v256
    %291 = vmatprep.subr.mxu0 0.0
    %292 = vmatpush1.msra.mxu0 %v257
    %293 = vmatprep.subr.mxu0 0.0
    %294 = vmatpush1.msra.mxu0 %v258
    %295 = vmatprep.subr.mxu0 0.0
    %296 = vmatpush1.msra.mxu0 %v259
    %297 = vmatprep.subr.mxu0 0.0
    %298 = vmatpush1.msra.mxu0 %v260
    %299 = vmatprep.subr.mxu0 0.0
    %300 = vmatpush1.msra.mxu0 %v261
    %301 = vmatprep.subr.mxu0 0.0
    %302 = vmatpush1.msra.mxu0 0.0
    %303 = vmatprep.subr.mxu0 0.0
    %304 = vmatpush1.msra.mxu0 0.0
    %305 = vmatprep.subr.mxu0 0.0
    %306 = vmatpush1.msra.mxu0 0.0
    %307 = vmatprep.subr.mxu0 0.0
    %308 = vmatpush1.msra.mxu0 0.0
    %309 = vmatprep.subr.mxu0 0.0
    %310 = vmatpush1.msra.mxu0 0.0
    %311 = vmatprep.subr.mxu0 0.0
    %312 = vmatpush1.msra.mxu0 0.0
    %313 = vmatprep.subr.mxu0 0.0
    %314 = vmatpush1.msra.mxu0 0.0
    %315 = vmatprep.subr.mxu0 0.0
    %316 = vmatpush1.msra.mxu0 0.0
    %317 = vmatprep.subr.mxu0 0.0
    %318 = vmatpush1.msra.mxu0 0.0
    %319 = vmatprep.subr.mxu0 0.0
    %320 = vmatpush1.msra.mxu0 0.0
    %321 = vmatprep.subr.mxu0 0.0
    %322 = vmatpush1.msra.mxu0 0.0
    %323 = vmatprep.subr.mxu0 0.0
    %324 = vmatpush1.msra.mxu0 0.0
    %325 = vmatprep.subr.mxu0 0.0
    %326 = vmatpush1.msra.mxu0 0.0
    %327 = vmatprep.subr.mxu0 0.0
    %328 = vmatpush1.msra.mxu0 0.0
    %329 = vmatprep.subr.mxu0 0.0
    %330 = vmatpush1.msra.mxu0 0.0
    %331 = vmatprep.subr.mxu0 0.0
    %332 = vmatpush1.msra.mxu0 0.0
    %333 = vmatprep.mubr.f32.mxu0 0.0
    %334 = vmatmul.mubr.f32.gmra.mrb[0].mxu0 %v245
    %v335 = vpop.f32.mrb[0].mxu0
    %v336 = vadd.f32 %v267, %v335
    %v337 = vpop.f32.mrb[0].mxu0
    %338 = vdwg.mxu0
    %339 = vst [vmem:[#allocation2] sm:$0xff] %v336
    // Predicated region
    $region38: #{net_forward.1} parent=1 // pred_check
      _
    $region39: #{net_forward.1} parent=1 // pred_check_branch
      %341 = sbr.rel (0) target = $region41
    $region40: #{net_forward.1} parent=1 // pred_region
      %s343 = ssub.s32 128, 128
      %344 = vsyncadd [#allocation3], %s343
      %s346 = sshll.u32 [#allocation2], 4
      %s347 = int_to_ptr.vmem [resolvable:$true] %s346
      %349 = dma.vmem_to_hbm [thread:$0]  %s347, 128, %s9, [#allocation3]
    $region41: #{net_forward.1} parent=1 // pred_fallthru
      _
    // Predicated region
    $region42: #{net_forward.1} parent=1 // pred_check
      _
    $region43: #{net_forward.1} parent=1 // pred_check_branch
      %351 = sbr.rel (0) target = $region45
    $region44: #{net_forward.1} parent=1 // pred_region
      %352 = dma.done [#allocation3], 128
    $region45: #{net_forward.1} parent=1 // pred_fallthru
      _
    %353 = vsyncpa [#allocation3], 1

</llo_original>
